<compile_context>
chip_gen: v6e
topology: v6e:2x2x1
jax: 0.10.0
libtpu: 0.0.40
codegen_flags: <defaults>
</compile_context>

<pallas_src>
import functools

import jax
import jax.numpy as jnp
from jax.experimental import pallas as pl
from jax.experimental.pallas import tpu as pltpu

BN_EPS = 1e-5
SUBLANE = 8
_TILE_VMEM_BUDGET = 24 * 1024 * 1024   # streamed (double-buffered) blocks budget
_FAST_PATH_BYTES = 6 * 1024 * 1024     # whole-batch-in-VMEM fused path threshold
_VMEM_LIMIT = 48 * 1024 * 1024         # scoped VMEM limit (< 64 MiB v7x physical)


def _round_up(v, m):
    return (v + m - 1) // m * m


def _row_valid(tile_rows, n_valid):
    """(tile_rows, 1) bool: rows of this grid tile that belong to the real batch."""
    i = pl.program_id(0)
    rows = jax.lax.broadcasted_iota(jnp.int32, (tile_rows, 1), 0) + i * tile_rows
    return rows < n_valid


# ----------------------------- tiled-path kernels ---------------------------

def _layer1_kernel(x_ref, w1_ref, b1_ref, h1_ref, s_ref, ss_ref, *, n_valid):
    """h1 = relu(x @ w1 + b1) (f32 accum), stored in io dtype; masked BN1 partials."""
    h = jnp.dot(x_ref[...], w1_ref[...], preferred_element_type=jnp.float32)
    h = jnp.maximum(h + b1_ref[...], 0.0)
    h1_ref[...] = h.astype(h1_ref.dtype)
    # jnp.where (select), not multiply-by-mask: clipped boundary rows may be NaN.
    hm = jnp.where(_row_valid(h.shape[0], n_valid), h, 0.0)
    s_ref[...] = jnp.sum(hm, axis=0, keepdims=True)[None]
    ss_ref[...] = jnp.sum(hm * hm, axis=0, keepdims=True)[None]


def _layer2_stats_kernel(h1_ref, w2_ref, b2_ref, s_ref, ss_ref, *, n_valid):
    """h2 = relu(bn1(h1) @ w2 + b2) with bn1 pre-folded into (w2, b2).
    Emits only the masked BN2 partial sums; h2 is never written to HBM."""
    h2 = jnp.dot(h1_ref[...], w2_ref[...], preferred_element_type=jnp.float32)
    h2 = jnp.maximum(h2 + b2_ref[...], 0.0)
    hm = jnp.where(_row_valid(h2.shape[0], n_valid), h2, 0.0)
    s_ref[...] = jnp.sum(hm, axis=0, keepdims=True)[None]
    ss_ref[...] = jnp.sum(hm * hm, axis=0, keepdims=True)[None]


def _head_kernel(h1_ref, w2_ref, b2_ref, w3_ref, b3_ref, o_ref):
    """Recompute h2 (tiny matmul) and apply the bn2-folded head; store the output
    at true num_class width (no lane padding, no post-kernel slice)."""
    h2 = jnp.dot(h1_ref[...], w2_ref[...], preferred_element_type=jnp.float32)
    h2 = jnp.maximum(h2 + b2_ref[...], 0.0)
    out = jnp.dot(h2, w3_ref[...], preferred_element_type=jnp.float32)
    o_ref[...] = (out + b3_ref[...]).astype(o_ref.dtype)


# ----------------------------- fused fast-path kernel -----------------------

def _fused_kernel(x_ref, w1_ref, b1_ref, g1_ref, be1_ref,
                  w2_ref, b2_ref, g2_ref, be2_ref, w3_ref, b3_ref, o_ref):
    """Whole MLP + both (training-mode) BatchNorms in one kernel; two-pass variance."""
    def bn(h, g, be):
        mean = jnp.mean(h, axis=0, keepdims=True)
        c = h - mean
        var = jnp.mean(c * c, axis=0, keepdims=True)    # two-pass: robust
        return c * jax.lax.rsqrt(var + BN_EPS) * g + be

    h1 = jnp.dot(x_ref[...], w1_ref[...], preferred_element_type=jnp.float32)
    h1 = jnp.maximum(h1 + b1_ref[...], 0.0)
    hn1 = bn(h1, g1_ref[...], be1_ref[...])
    h2 = jnp.dot(hn1, w2_ref[...], preferred_element_type=jnp.float32)
    h2 = jnp.maximum(h2 + b2_ref[...], 0.0)
    hn2 = bn(h2, g2_ref[...], be2_ref[...])
    out = jnp.dot(hn2, w3_ref[...], preferred_element_type=jnp.float32)
    o_ref[...] = (out + b3_ref[...]).astype(o_ref.dtype)


# ----------------------------- BN stats -> affine ----------------------------

def _bn_affine(psum, psumsq, gamma, beta, n):
    """Fold full-batch training-mode BN (biased var) into per-feature (scale, shift)."""
    total = jnp.sum(psum, axis=0)        # (1, F)
    total_sq = jnp.sum(psumsq, axis=0)   # (1, F)
    mean = total / n
    # One-pass E[h^2]-mean^2 in f32 with clamp; fine at these magnitudes.
    var = jnp.maximum(total_sq / n - mean * mean, 0.0)
    scale = gamma * jax.lax.rsqrt(var + BN_EPS)
    shift = beta - mean * scale
    return scale, shift


# ----------------------------------- wrapper ---------------------------------

@functools.partial(jax.jit, static_argnames=("tile_n", "io_dtype", "force_tiled"))
def pixel_classifier_forward(x, params, *, tile_n=1024, io_dtype=jnp.bfloat16,
                             force_tiled=False):
    """Forward pass of pixel_classifier (training-mode BatchNorm1d, eps=1e-5)."""
    (w1, b1, g1, be1, w2, b2, g2, be2, w3, b3) = params
    n, dim = x.shape
    h1_f = w1.shape[1]
    h2_f = w2.shape[1]
    num_class = w3.shape[1]
    f32 = jnp.float32
    io_bytes = jnp.dtype(io_dtype).itemsize

    x_io = x.astype(io_dtype)
    w1_io = w1.astype(io_dtype)

    # ---- fused single-kernel fast path: whole batch + weights fit in VMEM ----
    fused_bytes = (n * (dim * io_bytes + 2 * h1_f * 4 + 2 * h2_f * 4 + num_class * 4)
                   + dim * h1_f * io_bytes + (h1_f * h2_f + h2_f * num_class) * 4)
    if (not force_tiled) and fused_bytes <= _FAST_PATH_BYTES:
        return pl.pallas_call(
            _fused_kernel,
            out_shape=jax.ShapeDtypeStruct((n, num_class), f32),
            compiler_params=pltpu.CompilerParams(vmem_limit_bytes=_VMEM_LIMIT),
        )(x_io, w1_io, b1, g1, be1, w2, b2, g2, be2, w3, b3)

    # ------------------------------ tiled path --------------------------------
    # Row-tile size: large (>=512 preferred), capped by the VMEM budget
    # (phase-1 streams x + h1, double-buffered) and capped so nt >= 2 row tiles
    # keep both v7x TensorCores fed.
    per_row_bytes = (dim + h1_f) * io_bytes
    budget_rows = max(SUBLANE, _TILE_VMEM_BUDGET // (2 * per_row_bytes))
    tile_rows = min(tile_n, budget_rows, _round_up(pl.cdiv(n, 2), SUBLANE))
    tile_rows = max(SUBLANE, tile_rows // SUBLANE * SUBLANE)
    nt = pl.cdiv(n, tile_rows)

    cparams = pltpu.CompilerParams(
        dimension_semantics=("parallel",),       # independent row tiles (megacore)
        vmem_limit_bytes=_VMEM_LIMIT,
    )
    # TODO(synk): pipeline_mode=pl.Buffered(1) on the resident weight specs would
    #             reclaim one w1-sized VMEM buffer for very large `dim` on v7x.

    def row_spec(cols):
        return pl.BlockSpec((tile_rows, cols), lambda i: (i, 0))

    def resident(shape):
        nd = len(shape)
        return pl.BlockSpec(shape, lambda i: (0,) * nd)

    def stats_spec(cols):
        return pl.BlockSpec((1, 1, cols), lambda i: (i, 0, 0))

    def stats_shape(cols):
        return jax.ShapeDtypeStruct((nt, 1, cols), f32)

    # phase 1: Linear(dim,H1) + ReLU -> h1 (io dtype) + masked BN1 partials
    h1, s1, ss1 = pl.pallas_call(
        functools.partial(_layer1_kernel, n_valid=n),
        grid=(nt,),
        in_specs=[row_spec(dim), resident((dim, h1_f)), resident((1, h1_f))],
        out_specs=(row_spec(h1_f), stats_spec(h1_f), stats_spec(h1_f)),
        out_shape=(jax.ShapeDtypeStruct((n, h1_f), io_dtype),
                   stats_shape(h1_f), stats_shape(h1_f)),
        compiler_params=cparams,
    )(x_io, w1_io, b1)

    sc1, sh1 = _bn_affine(s1, ss1, g1, be1, n)
    w2f = sc1.reshape(-1, 1) * w2          # fold BN1 into Linear2 (tiny, under jit)
    b2f = sh1 @ w2 + b2

    # phase 2: masked BN2 partial stats only -- h2 never round-trips through HBM
    s2, ss2 = pl.pallas_call(
        functools.partial(_layer2_stats_kernel, n_valid=n),
        grid=(nt,),
        in_specs=[row_spec(h1_f), resident((h1_f, h2_f)), resident((1, h2_f))],
        out_specs=(stats_spec(h2_f), stats_spec(h2_f)),
        out_shape=(stats_shape(h2_f), stats_shape(h2_f)),
        compiler_params=cparams,
    )(h1, w2f, b2f)

    sc2, sh2 = _bn_affine(s2, ss2, g2, be2, n)
    w3f = sc2.reshape(-1, 1) * w3          # fold BN2 into the classifier head
    b3f = sh2 @ w3 + b3

    # phase 3: recompute h2 from h1, emit output at true num_class width
    out = pl.pallas_call(
        _head_kernel,
        grid=(nt,),
        in_specs=[row_spec(h1_f), resident((h1_f, h2_f)), resident((1, h2_f)),
                  resident((h2_f, num_class)), resident((1, num_class))],
        out_specs=row_spec(num_class),
        out_shape=jax.ShapeDtypeStruct((n, num_class), f32),
        compiler_params=cparams,
    )(h1, w2f, b2f, w3f, b3f)

    return out


# --------------------------- init & pure-JAX reference ----------------------

def init_params(key, dim, numpy_class, gain=0.02):
    """init_weights(init_type='normal', gain=0.02): Linear W ~ N(0, gain), b = 0;
    BatchNorm gamma = 1, beta = 0.  Weights stored as (in, out) (torch W^T)."""
    h1_f, h2_f = (128, 32) if numpy_class < 30 else (256, 128)
    k1, k2, k3 = jax.random.split(key, 3)
    w1 = gain * jax.random.normal(k1, (dim, h1_f), jnp.float32)
    w2 = gain * jax.random.normal(k2, (h1_f, h2_f), jnp.float32)
    w3 = gain * jax.random.normal(k3, (h2_f, numpy_class), jnp.float32)
    b1 = jnp.zeros((1, h1_f), jnp.float32)
    b2 = jnp.zeros((1, h2_f), jnp.float32)
    b3 = jnp.zeros((1, numpy_class), jnp.float32)
    g1 = jnp.ones((1, h1_f), jnp.float32)
    be1 = jnp.zeros((1, h1_f), jnp.float32)
    g2 = jnp.ones((1, h2_f), jnp.float32)
    be2 = jnp.zeros((1, h2_f), jnp.float32)
    return (w1, b1, g1, be1, w2, b2, g2, be2, w3, b3)


def reference_forward(x, params):
    """Pure-JAX f32 reference (training-mode BatchNorm, biased variance)."""
    (w1, b1, g1, be1, w2, b2, g2, be2, w3, b3) = params

    def bn(h, gamma, beta):
        mean = jnp.mean(h, axis=0, keepdims=True)
        var = jnp.mean((h - mean) * (h - mean), axis=0, keepdims=True)
        return (h - mean) * jax.lax.rsqrt(var + BN_EPS) * gamma + beta

    h = jnp.maximum(x @ w1 + b1, 0.0)
    h = bn(h, g1, be1)
    h = jnp.maximum(h @ w2 + b2, 0.0)
    h = bn(h, g2, be2)
    return h @ w3 + b3


if __name__ == "__main__":
    key = jax.random.PRNGKey(0)
    kx1, kp1, kx2, kp2 = jax.random.split(key, 4)

    # --- small-class branch, fused single-kernel fast path -------------------
    N1, DIM1, C1 = 200, 32, 10
    x1 = jax.random.normal(kx1, (N1, DIM1), jnp.float32)
    p1 = init_params(kp1, DIM1, C1)
    ref1 = reference_forward(x1, p1)

    out1_bf16 = jax.block_until_ready(pixel_classifier_forward(x1, p1))
    assert out1_bf16.shape == (N1, C1)
    assert jnp.allclose(out1_bf16, ref1, atol=2e-2, rtol=2e-2), float(
        jnp.max(jnp.abs(out1_bf16 - ref1)))

    out1_f32 = jax.block_until_ready(
        pixel_classifier_forward(x1, p1, io_dtype=jnp.float32))
    assert jnp.allclose(out1_f32, ref1, atol=1e-4, rtol=1e-4), float(
        jnp.max(jnp.abs(out1_f32 - ref1)))

    # --- tiled 3-phase path: ragged tail, non-128 dim, multiple row tiles ----
    N2, DIM2, C2 = 1490, 48, 7
    x2 = jax.random.normal(kx2, (N2, DIM2), jnp.float32)
    p2 = init_params(kp2, DIM2, C2)
    ref2 = reference_forward(x2, p2)

    out2_bf16 = jax.block_until_ready(
        pixel_classifier_forward(x2, p2, tile_n=512, force_tiled=True))
    assert out2_bf16.shape == (N2, C2)
    assert jnp.allclose(out2_bf16, ref2, atol=2e-2, rtol=2e-2), float(
        jnp.max(jnp.abs(out2_bf16 - ref2)))

    out2_f32 = jax.block_until_ready(
        pixel_classifier_forward(x2, p2, tile_n=512, io_dtype=jnp.float32,
                                 force_tiled=True))
    assert jnp.allclose(out2_f32, ref2, atol=1e-4, rtol=1e-4), float(
        jnp.max(jnp.abs(out2_f32 - ref2)))

    print("KERNEL_OK")
</pallas_src>

<mosaic_0001>
module attributes {stable_mosaic.version = 11 : i64} {
  func.func @_fused_kernel(%arg0: memref<200x32xbf16, #tpu.memory_space<vmem>>, %arg1: memref<32x128xbf16, #tpu.memory_space<vmem>>, %arg2: memref<1x128xf32, #tpu.memory_space<vmem>>, %arg3: memref<1x128xf32, #tpu.memory_space<vmem>>, %arg4: memref<1x128xf32, #tpu.memory_space<vmem>>, %arg5: memref<128x32xf32, #tpu.memory_space<vmem>>, %arg6: memref<1x32xf32, #tpu.memory_space<vmem>>, %arg7: memref<1x32xf32, #tpu.memory_space<vmem>>, %arg8: memref<1x32xf32, #tpu.memory_space<vmem>>, %arg9: memref<32x10xf32, #tpu.memory_space<vmem>>, %arg10: memref<1x10xf32, #tpu.memory_space<vmem>>, %arg11: memref<200x10xf32, #tpu.memory_space<vmem>>) attributes {dimension_semantics = [], scalar_prefetch = 0 : i64, scratch_operands = 0 : i64, tpu.core_type = #tpu.core_type<tc>} {
    %c0 = arith.constant 0 : index
    %c0_0 = arith.constant 0 : index
    %0 = vector.load %arg0[%c0, %c0_0] : memref<200x32xbf16, #tpu.memory_space<vmem>>, vector<200x32xbf16>
    %c0_1 = arith.constant 0 : index
    %c0_2 = arith.constant 0 : index
    %1 = vector.load %arg1[%c0_1, %c0_2] : memref<32x128xbf16, #tpu.memory_space<vmem>>, vector<32x128xbf16>
    %cst = arith.constant dense<0.000000e+00> : vector<200x128xf32>
    %2 = tpu.matmul %0, %1, %cst {dimension_numbers = #tpu.dot_dimension_numbers<[1], [0], [0], [1], [0, 0, 1, 1], [], []>} : vector<200x32xbf16>, vector<32x128xbf16>, vector<200x128xf32> -> vector<200x128xf32>
    %c0_3 = arith.constant 0 : index
    %c0_4 = arith.constant 0 : index
    %3 = vector.load %arg2[%c0_3, %c0_4] : memref<1x128xf32, #tpu.memory_space<vmem>>, vector<1x128xf32>
    %4 = vector.broadcast %3 : vector<1x128xf32> to vector<200x128xf32>
    %5 = arith.addf %2, %4 : vector<200x128xf32>
    %cst_5 = arith.constant 0.000000e+00 : f32
    %6 = vector.broadcast %cst_5 : f32 to vector<200x128xf32>
    %7 = arith.maximumf %5, %6 : vector<200x128xf32>
    %c0_6 = arith.constant 0 : index
    %c0_7 = arith.constant 0 : index
    %8 = vector.load %arg3[%c0_6, %c0_7] : memref<1x128xf32, #tpu.memory_space<vmem>>, vector<1x128xf32>
    %c0_8 = arith.constant 0 : index
    %c0_9 = arith.constant 0 : index
    %9 = vector.load %arg4[%c0_8, %c0_9] : memref<1x128xf32, #tpu.memory_space<vmem>>, vector<1x128xf32>
    %cst_10 = arith.constant dense<0.000000e+00> : vector<128xf32>
    %10 = vector.multi_reduction <add>, %7, %cst_10 [0] : vector<200x128xf32> to vector<128xf32>
    %11 = vector.shape_cast %10 : vector<128xf32> to vector<1x128xf32>
    %cst_11 = arith.constant 2.000000e+02 : f32
    %12 = vector.broadcast %cst_11 : f32 to vector<1x128xf32>
    %13 = arith.divf %11, %12 : vector<1x128xf32>
    %14 = vector.broadcast %13 : vector<1x128xf32> to vector<200x128xf32>
    %15 = arith.subf %7, %14 : vector<200x128xf32>
    %16 = arith.mulf %15, %15 : vector<200x128xf32>
    %cst_12 = arith.constant dense<0.000000e+00> : vector<128xf32>
    %17 = vector.multi_reduction <add>, %16, %cst_12 [0] : vector<200x128xf32> to vector<128xf32>
    %18 = vector.shape_cast %17 : vector<128xf32> to vector<1x128xf32>
    %cst_13 = arith.constant 2.000000e+02 : f32
    %19 = vector.broadcast %cst_13 : f32 to vector<1x128xf32>
    %20 = arith.divf %18, %19 : vector<1x128xf32>
    %cst_14 = arith.constant 9.99999974E-6 : f32
    %21 = vector.broadcast %cst_14 : f32 to vector<1x128xf32>
    %22 = arith.addf %20, %21 : vector<1x128xf32>
    %23 = math.rsqrt %22 : vector<1x128xf32>
    %24 = vector.broadcast %23 : vector<1x128xf32> to vector<200x128xf32>
    %25 = arith.mulf %15, %24 : vector<200x128xf32>
    %26 = vector.broadcast %8 : vector<1x128xf32> to vector<200x128xf32>
    %27 = arith.mulf %25, %26 : vector<200x128xf32>
    %28 = vector.broadcast %9 : vector<1x128xf32> to vector<200x128xf32>
    %29 = arith.addf %27, %28 : vector<200x128xf32>
    %c0_15 = arith.constant 0 : index
    %c0_16 = arith.constant 0 : index
    %30 = vector.load %arg5[%c0_15, %c0_16] : memref<128x32xf32, #tpu.memory_space<vmem>>, vector<128x32xf32>
    %cst_17 = arith.constant dense<0.000000e+00> : vector<200x32xf32>
    %31 = tpu.matmul %29, %30, %cst_17 {dimension_numbers = #tpu.dot_dimension_numbers<[1], [0], [0], [1], [0, 0, 1, 1], [], []>} : vector<200x128xf32>, vector<128x32xf32>, vector<200x32xf32> -> vector<200x32xf32>
    %c0_18 = arith.constant 0 : index
    %c0_19 = arith.constant 0 : index
    %32 = vector.load %arg6[%c0_18, %c0_19] : memref<1x32xf32, #tpu.memory_space<vmem>>, vector<1x32xf32>
    %33 = vector.broadcast %32 : vector<1x32xf32> to vector<200x32xf32>
    %34 = arith.addf %31, %33 : vector<200x32xf32>
    %cst_20 = arith.constant 0.000000e+00 : f32
    %35 = vector.broadcast %cst_20 : f32 to vector<200x32xf32>
    %36 = arith.maximumf %34, %35 : vector<200x32xf32>
    %c0_21 = arith.constant 0 : index
    %c0_22 = arith.constant 0 : index
    %37 = vector.load %arg7[%c0_21, %c0_22] : memref<1x32xf32, #tpu.memory_space<vmem>>, vector<1x32xf32>
    %c0_23 = arith.constant 0 : index
    %c0_24 = arith.constant 0 : index
    %38 = vector.load %arg8[%c0_23, %c0_24] : memref<1x32xf32, #tpu.memory_space<vmem>>, vector<1x32xf32>
    %cst_25 = arith.constant dense<0.000000e+00> : vector<32xf32>
    %39 = vector.multi_reduction <add>, %36, %cst_25 [0] : vector<200x32xf32> to vector<32xf32>
    %40 = vector.shape_cast %39 : vector<32xf32> to vector<1x32xf32>
    %cst_26 = arith.constant 2.000000e+02 : f32
    %41 = vector.broadcast %cst_26 : f32 to vector<1x32xf32>
    %42 = arith.divf %40, %41 : vector<1x32xf32>
    %43 = vector.broadcast %42 : vector<1x32xf32> to vector<200x32xf32>
    %44 = arith.subf %36, %43 : vector<200x32xf32>
    %45 = arith.mulf %44, %44 : vector<200x32xf32>
    %cst_27 = arith.constant dense<0.000000e+00> : vector<32xf32>
    %46 = vector.multi_reduction <add>, %45, %cst_27 [0] : vector<200x32xf32> to vector<32xf32>
    %47 = vector.shape_cast %46 : vector<32xf32> to vector<1x32xf32>
    %cst_28 = arith.constant 2.000000e+02 : f32
    %48 = vector.broadcast %cst_28 : f32 to vector<1x32xf32>
    %49 = arith.divf %47, %48 : vector<1x32xf32>
    %cst_29 = arith.constant 9.99999974E-6 : f32
    %50 = vector.broadcast %cst_29 : f32 to vector<1x32xf32>
    %51 = arith.addf %49, %50 : vector<1x32xf32>
    %52 = math.rsqrt %51 : vector<1x32xf32>
    %53 = vector.broadcast %52 : vector<1x32xf32> to vector<200x32xf32>
    %54 = arith.mulf %44, %53 : vector<200x32xf32>
    %55 = vector.broadcast %37 : vector<1x32xf32> to vector<200x32xf32>
    %56 = arith.mulf %54, %55 : vector<200x32xf32>
    %57 = vector.broadcast %38 : vector<1x32xf32> to vector<200x32xf32>
    %58 = arith.addf %56, %57 : vector<200x32xf32>
    %c0_30 = arith.constant 0 : index
    %c0_31 = arith.constant 0 : index
    %59 = vector.load %arg9[%c0_30, %c0_31] : memref<32x10xf32, #tpu.memory_space<vmem>>, vector<32x10xf32>
    %cst_32 = arith.constant dense<0.000000e+00> : vector<200x10xf32>
    %60 = tpu.matmul %58, %59, %cst_32 {dimension_numbers = #tpu.dot_dimension_numbers<[1], [0], [0], [1], [0, 0, 1, 1], [], []>} : vector<200x32xf32>, vector<32x10xf32>, vector<200x10xf32> -> vector<200x10xf32>
    %c0_33 = arith.constant 0 : index
    %c0_34 = arith.constant 0 : index
    %61 = vector.load %arg10[%c0_33, %c0_34] : memref<1x10xf32, #tpu.memory_space<vmem>>, vector<1x10xf32>
    %62 = vector.broadcast %61 : vector<1x10xf32> to vector<200x10xf32>
    %63 = arith.addf %60, %62 : vector<200x10xf32>
    %c0_35 = arith.constant 0 : index
    %c0_36 = arith.constant 0 : index
    %64 = vector.load %arg11[%c0_35, %c0_36] : memref<200x10xf32, #tpu.memory_space<vmem>>, vector<200x10xf32>
    tpu.vector_store %arg11[%c0_35, %c0_36], %63 {strides = array<i32>} : memref<200x10xf32, #tpu.memory_space<vmem>>, vector<200x10xf32>,
    return
  }
}

</mosaic_0001>

<llo_original>
// kernel: pixel_classifier_forward.1
$region0: #{pixel_classifier_forward.1}
  #allocation0 [shape = 'u32[]', space=smem, size = 0x4, offset = 0x4, fixed_abs, tag = 'smem constant byte address 0x4 - core index']
  #allocation1 [shape = 'u32[144,128]{1,0:T(1,128)}', space=vmem, size = 0x12000, scoped, tag = 'internal scratch']
  %s0 = inlined_call_operand.vmem [shape: bf16[200,32], index: 0, kind: input, shape index: {}]
  %s1 = inlined_call_operand.vmem [shape: bf16[32,128], index: 1, kind: input, shape index: {}]
  %s2 = inlined_call_operand.vmem [shape: f32[1,128], index: 2, kind: input, shape index: {}]
  %s3 = inlined_call_operand.vmem [shape: f32[1,128], index: 3, kind: input, shape index: {}]
  %s4 = inlined_call_operand.vmem [shape: f32[1,128], index: 4, kind: input, shape index: {}]
  %s5 = inlined_call_operand.vmem [shape: f32[128,32], index: 5, kind: input, shape index: {}]
  %s6 = inlined_call_operand.vmem [shape: f32[1,32], index: 6, kind: input, shape index: {}]
  %s7 = inlined_call_operand.vmem [shape: f32[1,32], index: 7, kind: input, shape index: {}]
  %s8 = inlined_call_operand.vmem [shape: f32[1,32], index: 8, kind: input, shape index: {}]
  %s9 = inlined_call_operand.vmem [shape: f32[32,10], index: 9, kind: input, shape index: {}]
  %s10 = inlined_call_operand.vmem [shape: f32[1,10], index: 10, kind: input, shape index: {}]
  %s11 = inlined_call_operand.vmem [shape: f32[200,10], index: 11, kind: output, shape index: {}]
  %s12 = sld [smem:[#allocation0]]
  $region54: #{pixel_classifier_forward.1} parent=0
    _
  %s14 = ssub.s32 1, %s12
  %s15 = scalar_select 0, %s14, %s12
  // Predicated region
  $region2: #{pixel_classifier_forward.1} parent=0 // pred_check
    _
  $region3: #{pixel_classifier_forward.1} parent=0 // pred_check_branch
    %17 = sbr.rel (0) target = $region5
  $region4: #{pixel_classifier_forward.1} parent=0 // pred_region
    _
  $region5: #{pixel_classifier_forward.1} parent=0 // pred_fallthru
    _
  // Predicated region
  $region6: #{pixel_classifier_forward.1} parent=0 // pred_check
    _
  $region7: #{pixel_classifier_forward.1} parent=0 // pred_check_branch
    %19 = sbr.rel (0) target = $region9
  $region8: #{pixel_classifier_forward.1} parent=0 // pred_region
    _
  $region9: #{pixel_classifier_forward.1} parent=0 // pred_fallthru
    _
  // Predicated region
  $region10: #{pixel_classifier_forward.1} parent=0 // pred_check
    _
  $region11: #{pixel_classifier_forward.1} parent=0 // pred_check_branch
    %21 = sbr.rel (0) target = $region13
  $region12: #{pixel_classifier_forward.1} parent=0 // pred_region
    _
  $region13: #{pixel_classifier_forward.1} parent=0 // pred_fallthru
    _
  // Predicated region
  $region14: #{pixel_classifier_forward.1} parent=0 // pred_check
    _
  $region15: #{pixel_classifier_forward.1} parent=0 // pred_check_branch
    %23 = sbr.rel (0) target = $region17
  $region16: #{pixel_classifier_forward.1} parent=0 // pred_region
    _
  $region17: #{pixel_classifier_forward.1} parent=0 // pred_fallthru
    _
  // Predicated region
  $region18: #{pixel_classifier_forward.1} parent=0 // pred_check
    _
  $region19: #{pixel_classifier_forward.1} parent=0 // pred_check_branch
    %25 = sbr.rel (0) target = $region21
  $region20: #{pixel_classifier_forward.1} parent=0 // pred_region
    _
  $region21: #{pixel_classifier_forward.1} parent=0 // pred_fallthru
    _
  // Predicated region
  $region22: #{pixel_classifier_forward.1} parent=0 // pred_check
    _
  $region23: #{pixel_classifier_forward.1} parent=0 // pred_check_branch
    %27 = sbr.rel (0) target = $region25
  $region24: #{pixel_classifier_forward.1} parent=0 // pred_region
    _
  $region25: #{pixel_classifier_forward.1} parent=0 // pred_fallthru
    _
  // Predicated region
  $region26: #{pixel_classifier_forward.1} parent=0 // pred_check
    _
  $region27: #{pixel_classifier_forward.1} parent=0 // pred_check_branch
    %29 = sbr.rel (0) target = $region29
  $region28: #{pixel_classifier_forward.1} parent=0 // pred_region
    _
  $region29: #{pixel_classifier_forward.1} parent=0 // pred_fallthru
    _
  // Predicated region
  $region30: #{pixel_classifier_forward.1} parent=0 // pred_check
    _
  $region31: #{pixel_classifier_forward.1} parent=0 // pred_check_branch
    %31 = sbr.rel (0) target = $region33
  $region32: #{pixel_classifier_forward.1} parent=0 // pred_region
    _
  $region33: #{pixel_classifier_forward.1} parent=0 // pred_fallthru
    _
  // Predicated region
  $region34: #{pixel_classifier_forward.1} parent=0 // pred_check
    _
  $region35: #{pixel_classifier_forward.1} parent=0 // pred_check_branch
    %33 = sbr.rel (0) target = $region37
  $region36: #{pixel_classifier_forward.1} parent=0 // pred_region
    _
  $region37: #{pixel_classifier_forward.1} parent=0 // pred_fallthru
    _
  // Predicated region
  $region38: #{pixel_classifier_forward.1} parent=0 // pred_check
    _
  $region39: #{pixel_classifier_forward.1} parent=0 // pred_check_branch
    %35 = sbr.rel (0) target = $region41
  $region40: #{pixel_classifier_forward.1} parent=0 // pred_region
    _
  $region41: #{pixel_classifier_forward.1} parent=0 // pred_fallthru
    _
  // Predicated region
  $region42: #{pixel_classifier_forward.1} parent=0 // pred_check
    _
  $region43: #{pixel_classifier_forward.1} parent=0 // pred_check_branch
    %37 = sbr.rel (0) target = $region45
  $region44: #{pixel_classifier_forward.1} parent=0 // pred_region
    _
  $region45: #{pixel_classifier_forward.1} parent=0 // pred_fallthru
    _
  %v39 = vld [vmem:[%s0] sm:$0xf]
  %v40 = vld [vmem:[%s0 + $0x4] sm:$0xf]
  %v41 = vld [vmem:[%s0 + $0x8] sm:$0xf]
  %v42 = vld [vmem:[%s0 + $0xc] sm:$0xf]
  %v43 = vld [vmem:[%s0 + $0x10] sm:$0xf]
  %v44 = vld [vmem:[%s0 + $0x14] sm:$0xf]
  %v45 = vld [vmem:[%s0 + $0x18] sm:$0xf]
  %v46 = vld [vmem:[%s0 + $0x1c] sm:$0xf]
  %v47 = vld [vmem:[%s0 + $0x20] sm:$0xf]
  %v48 = vld [vmem:[%s0 + $0x24] sm:$0xf]
  %v49 = vld [vmem:[%s0 + $0x28] sm:$0xf]
  %v50 = vld [vmem:[%s0 + $0x2c] sm:$0xf]
  %v51 = vld [vmem:[%s0 + $0x30] sm:$0xf]
  %v52 = vld [vmem:[%s0 + $0x34] sm:$0xf]
  %v53 = vld [vmem:[%s0 + $0x38] sm:$0xf]
  %v54 = vld [vmem:[%s0 + $0x3c] sm:$0xf]
  %v55 = vld [vmem:[%s0 + $0x40] sm:$0xf]
  %v56 = vld [vmem:[%s0 + $0x44] sm:$0xf]
  %v57 = vld [vmem:[%s0 + $0x48] sm:$0xf]
  %v58 = vld [vmem:[%s0 + $0x4c] sm:$0xf]
  %v59 = vld [vmem:[%s0 + $0x50] sm:$0xf]
  %v60 = vld [vmem:[%s0 + $0x54] sm:$0xf]
  %v61 = vld [vmem:[%s0 + $0x58] sm:$0xf]
  %v62 = vld [vmem:[%s0 + $0x5c] sm:$0xf]
  %v63 = vld [vmem:[%s0 + $0x60] sm:$0xf]
  %v64 = vld [vmem:[%s1] sm:$0xf]
  %v65 = vld [vmem:[%s1 + $0x4] sm:$0xf]
  %v66 = vld [vmem:[%s1 + $0x8] sm:$0xf]
  %v67 = vld [vmem:[%s1 + $0xc] sm:$0xf]
  %v68 = vld [vmem:[%s2] sm:$0x1]
  %v70 = vlaneseq
  %v71 = vshrl.u32 %v70, 7
  %v72 = vsub.s32 0, %v71
  %v73 = vrot.slane %v68, %v72
  %v100 = vunpack.c.l.b16 %v39
  %v101 = vunpack.c.l.b16 %v40
  %v102 = vunpack.c.l.b16 %v41
  %v103 = vunpack.c.l.b16 %v42
  %v104 = vunpack.c.l.b16 %v43
  %v105 = vunpack.c.l.b16 %v44
  %v106 = vunpack.c.l.b16 %v45
  %v107 = vunpack.c.l.b16 %v46
  %v108 = vunpack.c.l.b16 %v47
  %v109 = vunpack.c.l.b16 %v48
  %v110 = vunpack.c.l.b16 %v49
  %v111 = vunpack.c.l.b16 %v50
  %v112 = vunpack.c.l.b16 %v51
  %v113 = vunpack.c.l.b16 %v52
  %v114 = vunpack.c.l.b16 %v53
  %v115 = vunpack.c.l.b16 %v54
  %v116 = vunpack.c.l.b16 %v55
  %v117 = vunpack.c.l.b16 %v56
  %v118 = vunpack.c.l.b16 %v57
  %v119 = vunpack.c.l.b16 %v58
  %v120 = vunpack.c.l.b16 %v59
  %v121 = vunpack.c.l.b16 %v60
  %v122 = vunpack.c.l.b16 %v61
  %v123 = vunpack.c.l.b16 %v62
  %v124 = vunpack.c.l.b16 %v63
  %v125 = vpack.c.b16 %v101, %v100
  %v126 = vpack.c.b16 %v103, %v102
  %v127 = vpack.c.b16 %v105, %v104
  %v128 = vpack.c.b16 %v107, %v106
  %v129 = vpack.c.b16 %v109, %v108
  %v130 = vpack.c.b16 %v111, %v110
  %v131 = vpack.c.b16 %v113, %v112
  %v132 = vpack.c.b16 %v115, %v114
  %v133 = vpack.c.b16 %v117, %v116
  %v134 = vpack.c.b16 %v119, %v118
  %v135 = vpack.c.b16 %v121, %v120
  %v136 = vpack.c.b16 %v123, %v122
  %v137 = vpack.c.b16 %v124, %v124
  %v142 = vunpack.c.l.b16 %v64
  %v143 = vunpack.c.l.b16 %v65
  %v144 = vunpack.c.l.b16 %v66
  %v145 = vunpack.c.l.b16 %v67
  %v146 = vpack.c.b16 %v143, %v142
  %v147 = vpack.c.b16 %v145, %v144
  %vm150 = vcmask 261120
  %v152 = vsel %vm150, %v125, 0
  %v155 = vsel %vm150, %v126, 0
  %v158 = vsel %vm150, %v127, 0
  %v161 = vsel %vm150, %v128, 0
  %v164 = vsel %vm150, %v129, 0
  %v167 = vsel %vm150, %v130, 0
  %v170 = vsel %vm150, %v131, 0
  %v173 = vsel %vm150, %v132, 0
  %v176 = vsel %vm150, %v133, 0
  %v179 = vsel %vm150, %v134, 0
  %v182 = vsel %vm150, %v135, 0
  %v185 = vsel %vm150, %v136, 0
  %v188 = vsel %vm150, %v137, 0
  %190 = vmatprep.subr.bf16.mxu0 0
  %191 = vmatpush1.bf16.msra.mxu0 0
  %192 = vmatprep.subr.bf16.mxu0 0
  %193 = vmatpush1.bf16.msra.mxu0 0
  %194 = vmatprep.subr.bf16.mxu0 0
  %195 = vmatpush1.bf16.msra.mxu0 0
  %196 = vmatprep.subr.bf16.mxu0 0
  %197 = vmatpush1.bf16.msra.mxu0 0
  %198 = vmatprep.subr.bf16.mxu0 0
  %199 = vmatpush1.bf16.msra.mxu0 0
  %200 = vmatprep.subr.bf16.mxu0 0
  %201 = vmatpush1.bf16.msra.mxu0 0
  %202 = vmatprep.subr.bf16.mxu0 0
  %203 = vmatpush1.bf16.msra.mxu0 %v147
  %204 = vmatprep.subr.bf16.mxu0 0
  %205 = vmatpush1.bf16.msra.mxu0 %v146
  %206 = vmatprep.subr.bf16.mxu0 0
  %207 = vmatpush2.bf16.msra.mxu0 0
  %208 = vmatprep.subr.bf16.mxu0 0
  %209 = vmatpush2.bf16.msra.mxu0 0
  %210 = vmatprep.subr.bf16.mxu0 0
  %211 = vmatpush2.bf16.msra.mxu0 0
  %212 = vmatprep.subr.bf16.mxu0 0
  %213 = vmatpush2.bf16.msra.mxu0 0
  %214 = vmatprep.subr.bf16.mxu0 0
  %215 = vmatpush2.bf16.msra.mxu0 0
  %216 = vmatprep.subr.bf16.mxu0 0
  %217 = vmatpush2.bf16.msra.mxu0 0
  %218 = vmatprep.subr.bf16.mxu0 0
  %219 = vmatpush2.bf16.msra.mxu0 0
  %220 = vmatprep.subr.bf16.mxu0 0
  %221 = vmatpush2.bf16.msra.mxu0 0
  %222 = vmatprep.mubr.bf16.mxu0 0
  %223 = vmatmul.mubr.bf16.gmra.mxu0 %v152
  %v224 = vpop.f32.mrf.mxu0
  %v225 = vadd.f32 %v73, %v224
  %v226 = vpop.f32.mrf.mxu0
  %v227 = vpop.f32.mrf.mxu0
  %v228 = vadd.f32 %v73, %v227
  %v229 = vpop.f32.mrf.mxu0
  %230 = vmatprep.mubr.bf16.mxu0 0
  %231 = vmatmul.mubr.bf16.gmra.mxu0 %v155
  %v232 = vpop.f32.mrf.mxu0
  %v233 = vadd.f32 %v73, %v232
  %v234 = vpop.f32.mrf.mxu0
  %v235 = vpop.f32.mrf.mxu0
  %v236 = vadd.f32 %v73, %v235
  %v237 = vpop.f32.mrf.mxu0
  %238 = vmatprep.mubr.bf16.mxu0 0
  %239 = vmatmul.mubr.bf16.gmra.mxu0 %v158
  %v240 = vpop.f32.mrf.mxu0
  %v241 = vadd.f32 %v73, %v240
  %v242 = vpop.f32.mrf.mxu0
  %v243 = vpop.f32.mrf.mxu0
  %v244 = vadd.f32 %v73, %v243
  %v245 = vpop.f32.mrf.mxu0
  %246 = vmatprep.mubr.bf16.mxu0 0
  %247 = vmatmul.mubr.bf16.gmra.mxu0 %v161
  %v248 = vpop.f32.mrf.mxu0
  %v249 = vadd.f32 %v73, %v248
  %v250 = vpop.f32.mrf.mxu0
  %v251 = vpop.f32.mrf.mxu0
  %v252 = vadd.f32 %v73, %v251
  %v253 = vpop.f32.mrf.mxu0
  %254 = vmatprep.mubr.bf16.mxu0 0
  %255 = vmatmul.mubr.bf16.gmra.mxu0 %v164
  %v256 = vpop.f32.mrf.mxu0
  %v257 = vadd.f32 %v73, %v256
  %v258 = vpop.f32.mrf.mxu0
  %v259 = vpop.f32.mrf.mxu0
  %v260 = vadd.f32 %v73, %v259
  %v261 = vpop.f32.mrf.mxu0
  %262 = vmatprep.mubr.bf16.mxu0 0
  %263 = vmatmul.mubr.bf16.gmra.mxu0 %v167
  %v264 = vpop.f32.mrf.mxu0
  %v265 = vadd.f32 %v73, %v264
  %v266 = vpop.f32.mrf.mxu0
  %v267 = vpop.f32.mrf.mxu0
  %v268 = vadd.f32 %v73, %v267
  %v269 = vpop.f32.mrf.mxu0
  %270 = vmatprep.mubr.bf16.mxu0 0
  %271 = vmatmul.mubr.bf16.gmra.mxu0 %v170
  %v272 = vpop.f32.mrf.mxu0
  %v273 = vadd.f32 %v73, %v272
  %v274 = vpop.f32.mrf.mxu0
  %v275 = vpop.f32.mrf.mxu0
  %v276 = vadd.f32 %v73, %v275
  %v277 = vpop.f32.mrf.mxu0
  %278 = vmatprep.mubr.bf16.mxu0 0
  %279 = vmatmul.mubr.bf16.gmra.mxu0 %v173
  %v280 = vpop.f32.mrf.mxu0
  %v281 = vadd.f32 %v73, %v280
  %v282 = vpop.f32.mrf.mxu0
  %v283 = vpop.f32.mrf.mxu0
  %v284 = vadd.f32 %v73, %v283
  %v285 = vpop.f32.mrf.mxu0
  %286 = vmatprep.mubr.bf16.mxu0 0
  %287 = vmatmul.mubr.bf16.gmra.mxu0 %v176
  %v288 = vpop.f32.mrf.mxu0
  %v289 = vadd.f32 %v73, %v288
  %v290 = vpop.f32.mrf.mxu0
  %v291 = vpop.f32.mrf.mxu0
  %v292 = vadd.f32 %v73, %v291
  %v293 = vpop.f32.mrf.mxu0
  %294 = vmatprep.mubr.bf16.mxu0 0
  %295 = vmatmul.mubr.bf16.gmra.mxu0 %v179
  %v296 = vpop.f32.mrf.mxu0
  %v297 = vadd.f32 %v73, %v296
  %v298 = vpop.f32.mrf.mxu0
  %v299 = vpop.f32.mrf.mxu0
  %v300 = vadd.f32 %v73, %v299
  %v301 = vpop.f32.mrf.mxu0
  %302 = vmatprep.mubr.bf16.mxu0 0
  %303 = vmatmul.mubr.bf16.gmra.mxu0 %v182
  %v304 = vpop.f32.mrf.mxu0
  %v305 = vadd.f32 %v73, %v304
  %v306 = vpop.f32.mrf.mxu0
  %v307 = vpop.f32.mrf.mxu0
  %v308 = vadd.f32 %v73, %v307
  %v309 = vpop.f32.mrf.mxu0
  %310 = vmatprep.mubr.bf16.mxu0 0
  %311 = vmatmul.mubr.bf16.gmra.mxu0 %v185
  %v312 = vpop.f32.mrf.mxu0
  %v313 = vadd.f32 %v73, %v312
  %v314 = vpop.f32.mrf.mxu0
  %v315 = vpop.f32.mrf.mxu0
  %v316 = vadd.f32 %v73, %v315
  %v317 = vpop.f32.mrf.mxu0
  %318 = vmatprep.mubr.bf16.mxu0 0
  %319 = vmatmul.mubr.bf16.gmra.mxu0 %v188
  %v320 = vpop.f32.mrf.mxu0
  %v321 = vadd.f32 %v73, %v320
  %v322 = vpop.f32.mrf.mxu0
  %v323 = vpop.f32.mrf.mxu0
  %v324 = vpop.f32.mrf.mxu0
  %325 = vdwg.mxu0
  %v326 = vmax.f32 %v225, 0.0
  %v327 = vmax.f32 %v228, 0.0
  %v328 = vmax.f32 %v233, 0.0
  %v329 = vmax.f32 %v236, 0.0
  %v330 = vmax.f32 %v241, 0.0
  %v331 = vmax.f32 %v244, 0.0
  %v332 = vmax.f32 %v249, 0.0
  %v333 = vmax.f32 %v252, 0.0
  %v334 = vmax.f32 %v257, 0.0
  %v335 = vmax.f32 %v260, 0.0
  %v336 = vmax.f32 %v265, 0.0
  %v337 = vmax.f32 %v268, 0.0
  %v338 = vmax.f32 %v273, 0.0
  %v339 = vmax.f32 %v276, 0.0
  %v340 = vmax.f32 %v281, 0.0
  %v341 = vmax.f32 %v284, 0.0
  %v342 = vmax.f32 %v289, 0.0
  %v343 = vmax.f32 %v292, 0.0
  %v344 = vmax.f32 %v297, 0.0
  %v345 = vmax.f32 %v300, 0.0
  %v346 = vmax.f32 %v305, 0.0
  %v347 = vmax.f32 %v308, 0.0
  %v348 = vmax.f32 %v313, 0.0
  %v349 = vmax.f32 %v316, 0.0
  %v350 = vmax.f32 %v321, 0.0
  %v351 = vld [vmem:[%s3] sm:$0x1]
  %v352 = vld [vmem:[%s4] sm:$0x1]
  %v353 = vadd.f32 %v326, %v327
  %v354 = vadd.f32 %v353, %v328
  %v355 = vadd.f32 %v354, %v329
  %v356 = vadd.f32 %v355, %v330
  %v357 = vadd.f32 %v356, %v331
  %v358 = vadd.f32 %v357, %v332
  %v359 = vadd.f32 %v358, %v333
  %v360 = vadd.f32 %v359, %v334
  %v361 = vadd.f32 %v360, %v335
  %v362 = vadd.f32 %v361, %v336
  %v363 = vadd.f32 %v362, %v337
  %v364 = vadd.f32 %v363, %v338
  %v365 = vadd.f32 %v364, %v339
  %v366 = vadd.f32 %v365, %v340
  %v367 = vadd.f32 %v366, %v341
  %v368 = vadd.f32 %v367, %v342
  %v369 = vadd.f32 %v368, %v343
  %v370 = vadd.f32 %v369, %v344
  %v371 = vadd.f32 %v370, %v345
  %v372 = vadd.f32 %v371, %v346
  %v373 = vadd.f32 %v372, %v347
  %v374 = vadd.f32 %v373, %v348
  %v375 = vadd.f32 %v374, %v349
  %v376 = vadd.f32 %v375, %v350
  %v377 = vrot.slane %v376, 4
  %v378 = vadd.f32 %v376, %v377
  %v379 = vrot.slane %v378, 2
  %v380 = vadd.f32 %v378, %v379
  %v381 = vrot.slane %v380, 1
  %v382 = vadd.f32 %v380, %v381
  %v383 = vrcp.pop 200.0
  %v384 = vmul.f32 %v382, %v383
  %v385 = vsub.f32 %v326, %v384
  %v386 = vsub.f32 %v327, %v384
  %v387 = vsub.f32 %v328, %v384
  %v388 = vsub.f32 %v329, %v384
  %v389 = vsub.f32 %v330, %v384
  %v390 = vsub.f32 %v331, %v384
  %v391 = vsub.f32 %v332, %v384
  %v392 = vsub.f32 %v333, %v384
  %v393 = vsub.f32 %v334, %v384
  %v394 = vsub.f32 %v335, %v384
  %v395 = vsub.f32 %v336, %v384
  %v396 = vsub.f32 %v337, %v384
  %v397 = vsub.f32 %v338, %v384
  %v398 = vsub.f32 %v339, %v384
  %v399 = vsub.f32 %v340, %v384
  %v400 = vsub.f32 %v341, %v384
  %v401 = vsub.f32 %v342, %v384
  %v402 = vsub.f32 %v343, %v384
  %v403 = vsub.f32 %v344, %v384
  %v404 = vsub.f32 %v345, %v384
  %v405 = vsub.f32 %v346, %v384
  %v406 = vsub.f32 %v347, %v384
  %v407 = vsub.f32 %v348, %v384
  %v408 = vsub.f32 %v349, %v384
  %v409 = vsub.f32 %v350, %v384
  %v410 = vmul.f32 %v385, %v385
  %v411 = vmul.f32 %v386, %v386
  %v412 = vmul.f32 %v387, %v387
  %v413 = vmul.f32 %v388, %v388
  %v414 = vmul.f32 %v389, %v389
  %v415 = vmul.f32 %v390, %v390
  %v416 = vmul.f32 %v391, %v391
  %v417 = vmul.f32 %v392, %v392
  %v418 = vmul.f32 %v393, %v393
  %v419 = vmul.f32 %v394, %v394
  %v420 = vmul.f32 %v395, %v395
  %v421 = vmul.f32 %v396, %v396
  %v422 = vmul.f32 %v397, %v397
  %v423 = vmul.f32 %v398, %v398
  %v424 = vmul.f32 %v399, %v399
  %v425 = vmul.f32 %v400, %v400
  %v426 = vmul.f32 %v401, %v401
  %v427 = vmul.f32 %v402, %v402
  %v428 = vmul.f32 %v403, %v403
  %v429 = vmul.f32 %v404, %v404
  %v430 = vmul.f32 %v405, %v405
  %v431 = vmul.f32 %v406, %v406
  %v432 = vmul.f32 %v407, %v407
  %v433 = vmul.f32 %v408, %v408
  %v434 = vmul.f32 %v409, %v409
  %v435 = vadd.f32 %v410, %v411
  %v436 = vadd.f32 %v435, %v412
  %v437 = vadd.f32 %v436, %v413
  %v438 = vadd.f32 %v437, %v414
  %v439 = vadd.f32 %v438, %v415
  %v440 = vadd.f32 %v439, %v416
  %v441 = vadd.f32 %v440, %v417
  %v442 = vadd.f32 %v441, %v418
  %v443 = vadd.f32 %v442, %v419
  %v444 = vadd.f32 %v443, %v420
  %v445 = vadd.f32 %v444, %v421
  %v446 = vadd.f32 %v445, %v422
  %v447 = vadd.f32 %v446, %v423
  %v448 = vadd.f32 %v447, %v424
  %v449 = vadd.f32 %v448, %v425
  %v450 = vadd.f32 %v449, %v426
  %v451 = vadd.f32 %v450, %v427
  %v452 = vadd.f32 %v451, %v428
  %v453 = vadd.f32 %v452, %v429
  %v454 = vadd.f32 %v453, %v430
  %v455 = vadd.f32 %v454, %v431
  %v456 = vadd.f32 %v455, %v432
  %v457 = vadd.f32 %v456, %v433
  %v458 = vadd.f32 %v457, %v434
  %v459 = vrot.slane %v458, 4
  %v460 = vadd.f32 %v458, %v459
  %v461 = vrot.slane %v460, 2
  %v462 = vadd.f32 %v460, %v461
  %v463 = vrot.slane %v462, 1
  %v464 = vadd.f32 %v462, %v463
  %v465 = vmul.f32 %v464, %v383
  %v466 = vadd.f32 %v465, 1e-05
  %v467 = vrsqrt.pop %v466
  %v468 = vmul.f32 %v385, %v467
  %v469 = vmul.f32 %v386, %v467
  %v470 = vmul.f32 %v387, %v467
  %v471 = vmul.f32 %v388, %v467
  %v472 = vmul.f32 %v389, %v467
  %v473 = vmul.f32 %v390, %v467
  %v474 = vmul.f32 %v391, %v467
  %v475 = vmul.f32 %v392, %v467
  %v476 = vmul.f32 %v393, %v467
  %v477 = vmul.f32 %v394, %v467
  %v478 = vmul.f32 %v395, %v467
  %v479 = vmul.f32 %v396, %v467
  %v480 = vmul.f32 %v397, %v467
  %v481 = vmul.f32 %v398, %v467
  %v482 = vmul.f32 %v399, %v467
  %v483 = vmul.f32 %v400, %v467
  %v484 = vmul.f32 %v401, %v467
  %v485 = vmul.f32 %v402, %v467
  %v486 = vmul.f32 %v403, %v467
  %v487 = vmul.f32 %v404, %v467
  %v488 = vmul.f32 %v405, %v467
  %v489 = vmul.f32 %v406, %v467
  %v490 = vmul.f32 %v407, %v467
  %v491 = vmul.f32 %v408, %v467
  %v492 = vmul.f32 %v409, %v467
  %v494 = vlaneseq
  %v495 = vshrl.u32 %v494, 7
  %v496 = vsub.s32 0, %v495
  %v497 = vrot.slane %v351, %v496
  %v499 = vmul.f32 %v468, %v497
  %v500 = vmul.f32 %v469, %v497
  %v501 = vmul.f32 %v470, %v497
  %v502 = vmul.f32 %v471, %v497
  %v503 = vmul.f32 %v472, %v497
  %v504 = vmul.f32 %v473, %v497
  %v505 = vmul.f32 %v474, %v497
  %v506 = vmul.f32 %v475, %v497
  %v507 = vmul.f32 %v476, %v497
  %v508 = vmul.f32 %v477, %v497
  %v509 = vmul.f32 %v478, %v497
  %v510 = vmul.f32 %v479, %v497
  %v511 = vmul.f32 %v480, %v497
  %v512 = vmul.f32 %v481, %v497
  %v513 = vmul.f32 %v482, %v497
  %v514 = vmul.f32 %v483, %v497
  %v515 = vmul.f32 %v484, %v497
  %v516 = vmul.f32 %v485, %v497
  %v517 = vmul.f32 %v486, %v497
  %v518 = vmul.f32 %v487, %v497
  %v519 = vmul.f32 %v488, %v497
  %v520 = vmul.f32 %v489, %v497
  %v521 = vmul.f32 %v490, %v497
  %v522 = vmul.f32 %v491, %v497
  %v523 = vmul.f32 %v492, %v497
  %v525 = vlaneseq
  %v526 = vshrl.u32 %v525, 7
  %v527 = vsub.s32 0, %v526
  %v528 = vrot.slane %v352, %v527
  %v530 = vadd.f32 %v499, %v528
  %v531 = vadd.f32 %v500, %v528
  %v532 = vadd.f32 %v501, %v528
  %v533 = vadd.f32 %v502, %v528
  %v534 = vadd.f32 %v503, %v528
  %v535 = vadd.f32 %v504, %v528
  %v536 = vadd.f32 %v505, %v528
  %v537 = vadd.f32 %v506, %v528
  %v538 = vadd.f32 %v507, %v528
  %v539 = vadd.f32 %v508, %v528
  %v540 = vadd.f32 %v509, %v528
  %v541 = vadd.f32 %v510, %v528
  %v542 = vadd.f32 %v511, %v528
  %v543 = vadd.f32 %v512, %v528
  %v544 = vadd.f32 %v513, %v528
  %v545 = vadd.f32 %v514, %v528
  %v546 = vadd.f32 %v515, %v528
  %v547 = vadd.f32 %v516, %v528
  %v548 = vadd.f32 %v517, %v528
  %v549 = vadd.f32 %v518, %v528
  %v550 = vadd.f32 %v519, %v528
  %v551 = vadd.f32 %v520, %v528
  %v552 = vadd.f32 %v521, %v528
  %v553 = vadd.f32 %v522, %v528
  %v554 = vadd.f32 %v523, %v528
  %v555 = vld [vmem:[%s5] sm:$0xff]
  %v556 = vld [vmem:[%s5 + $0x8] sm:$0xff]
  %v557 = vld [vmem:[%s5 + $0x10] sm:$0xff]
  %v558 = vld [vmem:[%s5 + $0x18] sm:$0xff]
  %v559 = vld [vmem:[%s5 + $0x20] sm:$0xff]
  %v560 = vld [vmem:[%s5 + $0x28] sm:$0xff]
  %v561 = vld [vmem:[%s5 + $0x30] sm:$0xff]
  %v562 = vld [vmem:[%s5 + $0x38] sm:$0xff]
  %v563 = vld [vmem:[%s5 + $0x40] sm:$0xff]
  %v564 = vld [vmem:[%s5 + $0x48] sm:$0xff]
  %v565 = vld [vmem:[%s5 + $0x50] sm:$0xff]
  %v566 = vld [vmem:[%s5 + $0x58] sm:$0xff]
  %v567 = vld [vmem:[%s5 + $0x60] sm:$0xff]
  %v568 = vld [vmem:[%s5 + $0x68] sm:$0xff]
  %v569 = vld [vmem:[%s5 + $0x70] sm:$0xff]
  %v570 = vld [vmem:[%s5 + $0x78] sm:$0xff]
  %v571 = vld [vmem:[%s6] sm:$0x1]
  %v573 = vlaneseq
  %v574 = vshrl.u32 %v573, 7
  %v575 = vsub.s32 0, %v574
  %v576 = vrot.slane %v571, %v575
  %578 = vmatprep.subr.mxu0 0.0
  %579 = vmatpush1.msra.mxu0 %v570
  %580 = vmatprep.subr.mxu0 0.0
  %581 = vmatpush1.msra.mxu0 %v569
  %582 = vmatprep.subr.mxu0 0.0
  %583 = vmatpush1.msra.mxu0 %v568
  %584 = vmatprep.subr.mxu0 0.0
  %585 = vmatpush1.msra.mxu0 %v567
  %586 = vmatprep.subr.mxu0 0.0
  %587 = vmatpush1.msra.mxu0 %v566
  %588 = vmatprep.subr.mxu0 0.0
  %589 = vmatpush1.msra.mxu0 %v565
  %590 = vmatprep.subr.mxu0 0.0
  %591 = vmatpush1.msra.mxu0 %v564
  %592 = vmatprep.subr.mxu0 0.0
  %593 = vmatpush1.msra.mxu0 %v563
  %594 = vmatprep.subr.mxu0 0.0
  %595 = vmatpush1.msra.mxu0 %v562
  %596 = vmatprep.subr.mxu0 0.0
  %597 = vmatpush1.msra.mxu0 %v561
  %598 = vmatprep.subr.mxu0 0.0
  %599 = vmatpush1.msra.mxu0 %v560
  %600 = vmatprep.subr.mxu0 0.0
  %601 = vmatpush1.msra.mxu0 %v559
  %602 = vmatprep.subr.mxu0 0.0
  %603 = vmatpush1.msra.mxu0 %v558
  %604 = vmatprep.subr.mxu0 0.0
  %605 = vmatpush1.msra.mxu0 %v557
  %606 = vmatprep.subr.mxu0 0.0
  %607 = vmatpush1.msra.mxu0 %v556
  %608 = vmatprep.subr.mxu0 0.0
  %609 = vmatpush1.msra.mxu0 %v555
  %610 = vmatprep.subr.mxu0 0.0
  %611 = vmatpush2.msra.mxu0 0.0
  %612 = vmatprep.subr.mxu0 0.0
  %613 = vmatpush2.msra.mxu0 0.0
  %614 = vmatprep.subr.mxu0 0.0
  %615 = vmatpush2.msra.mxu0 0.0
  %616 = vmatprep.subr.mxu0 0.0
  %617 = vmatpush2.msra.mxu0 0.0
  %618 = vmatprep.subr.mxu0 0.0
  %619 = vmatpush2.msra.mxu0 0.0
  %620 = vmatprep.subr.mxu0 0.0
  %621 = vmatpush2.msra.mxu0 0.0
  %622 = vmatprep.subr.mxu0 0.0
  %623 = vmatpush2.msra.mxu0 0.0
  %624 = vmatprep.subr.mxu0 0.0
  %625 = vmatpush2.msra.mxu0 0.0
  %626 = vmatprep.subr.mxu0 0.0
  %627 = vmatpush2.msra.mxu0 0.0
  %628 = vmatprep.subr.mxu0 0.0
  %629 = vmatpush2.msra.mxu0 0.0
  %630 = vmatprep.subr.mxu0 0.0
  %631 = vmatpush2.msra.mxu0 0.0
  %632 = vmatprep.subr.mxu0 0.0
  %633 = vmatpush2.msra.mxu0 0.0
  %634 = vmatprep.subr.mxu0 0.0
  %635 = vmatpush2.msra.mxu0 0.0
  %636 = vmatprep.subr.mxu0 0.0
  %637 = vmatpush2.msra.mxu0 0.0
  %638 = vmatprep.subr.mxu0 0.0
  %639 = vmatpush2.msra.mxu0 0.0
  %640 = vmatprep.subr.mxu0 0.0
  %641 = vmatpush2.msra.mxu0 0.0
  %642 = vmatprep.mubr.f32.mxu0 0.0
  %643 = vmatmul.mubr.f32.gmra.mxu0 %v530
  %v644 = vpop.f32.mrf.mxu0
  %v645 = vadd.f32 %v576, %v644
  %v646 = vpop.f32.mrf.mxu0
  %647 = vmatprep.mubr.f32.mxu0 0.0
  %648 = vmatmul.mubr.f32.gmra.mxu0 %v531
  %v649 = vpop.f32.mrf.mxu0
  %v650 = vadd.f32 %v576, %v649
  %v651 = vpop.f32.mrf.mxu0
  %652 = vmatprep.mubr.f32.mxu0 0.0
  %653 = vmatmul.mubr.f32.gmra.mxu0 %v532
  %v654 = vpop.f32.mrf.mxu0
  %v655 = vadd.f32 %v576, %v654
  %v656 = vpop.f32.mrf.mxu0
  %657 = vmatprep.mubr.f32.mxu0 0.0
  %658 = vmatmul.mubr.f32.gmra.mxu0 %v533
  %v659 = vpop.f32.mrf.mxu0
  %v660 = vadd.f32 %v576, %v659
  %v661 = vpop.f32.mrf.mxu0
  %662 = vmatprep.mubr.f32.mxu0 0.0
  %663 = vmatmul.mubr.f32.gmra.mxu0 %v534
  %v664 = vpop.f32.mrf.mxu0
  %v665 = vadd.f32 %v576, %v664
  %v666 = vpop.f32.mrf.mxu0
  %667 = vmatprep.mubr.f32.mxu0 0.0
  %668 = vmatmul.mubr.f32.gmra.mxu0 %v535
  %v669 = vpop.f32.mrf.mxu0
  %v670 = vadd.f32 %v576, %v669
  %v671 = vpop.f32.mrf.mxu0
  %672 = vmatprep.mubr.f32.mxu0 0.0
  %673 = vmatmul.mubr.f32.gmra.mxu0 %v536
  %v674 = vpop.f32.mrf.mxu0
  %v675 = vadd.f32 %v576, %v674
  %v676 = vpop.f32.mrf.mxu0
  %677 = vmatprep.mubr.f32.mxu0 0.0
  %678 = vmatmul.mubr.f32.gmra.mxu0 %v537
  %v679 = vpop.f32.mrf.mxu0
  %v680 = vadd.f32 %v576, %v679
  %v681 = vpop.f32.mrf.mxu0
  %682 = vmatprep.mubr.f32.mxu0 0.0
  %683 = vmatmul.mubr.f32.gmra.mxu0 %v538
  %v684 = vpop.f32.mrf.mxu0
  %v685 = vadd.f32 %v576, %v684
  %v686 = vpop.f32.mrf.mxu0
  %687 = vmatprep.mubr.f32.mxu0 0.0
  %688 = vmatmul.mubr.f32.gmra.mxu0 %v539
  %v689 = vpop.f32.mrf.mxu0
  %v690 = vadd.f32 %v576, %v689
  %v691 = vpop.f32.mrf.mxu0
  %692 = vmatprep.mubr.f32.mxu0 0.0
  %693 = vmatmul.mubr.f32.gmra.mxu0 %v540
  %v694 = vpop.f32.mrf.mxu0
  %v695 = vadd.f32 %v576, %v694
  %v696 = vpop.f32.mrf.mxu0
  %697 = vmatprep.mubr.f32.mxu0 0.0
  %698 = vmatmul.mubr.f32.gmra.mxu0 %v541
  %v699 = vpop.f32.mrf.mxu0
  %v700 = vadd.f32 %v576, %v699
  %v701 = vpop.f32.mrf.mxu0
  %702 = vmatprep.mubr.f32.mxu0 0.0
  %703 = vmatmul.mubr.f32.gmra.mxu0 %v542
  %v704 = vpop.f32.mrf.mxu0
  %v705 = vadd.f32 %v576, %v704
  %v706 = vpop.f32.mrf.mxu0
  %707 = vmatprep.mubr.f32.mxu0 0.0
  %708 = vmatmul.mubr.f32.gmra.mxu0 %v543
  %v709 = vpop.f32.mrf.mxu0
  %v710 = vadd.f32 %v576, %v709
  %v711 = vpop.f32.mrf.mxu0
  %712 = vmatprep.mubr.f32.mxu0 0.0
  %713 = vmatmul.mubr.f32.gmra.mxu0 %v544
  %v714 = vpop.f32.mrf.mxu0
  %v715 = vadd.f32 %v576, %v714
  %v716 = vpop.f32.mrf.mxu0
  %717 = vmatprep.mubr.f32.mxu0 0.0
  %718 = vmatmul.mubr.f32.gmra.mxu0 %v545
  %v719 = vpop.f32.mrf.mxu0
  %v720 = vadd.f32 %v576, %v719
  %v721 = vpop.f32.mrf.mxu0
  %722 = vmatprep.mubr.f32.mxu0 0.0
  %723 = vmatmul.mubr.f32.gmra.mxu0 %v546
  %v724 = vpop.f32.mrf.mxu0
  %v725 = vadd.f32 %v576, %v724
  %v726 = vpop.f32.mrf.mxu0
  %727 = vmatprep.mubr.f32.mxu0 0.0
  %728 = vmatmul.mubr.f32.gmra.mxu0 %v547
  %v729 = vpop.f32.mrf.mxu0
  %v730 = vadd.f32 %v576, %v729
  %v731 = vpop.f32.mrf.mxu0
  %732 = vmatprep.mubr.f32.mxu0 0.0
  %733 = vmatmul.mubr.f32.gmra.mxu0 %v548
  %v734 = vpop.f32.mrf.mxu0
  %v735 = vadd.f32 %v576, %v734
  %v736 = vpop.f32.mrf.mxu0
  %737 = vmatprep.mubr.f32.mxu0 0.0
  %738 = vmatmul.mubr.f32.gmra.mxu0 %v549
  %v739 = vpop.f32.mrf.mxu0
  %v740 = vadd.f32 %v576, %v739
  %v741 = vpop.f32.mrf.mxu0
  %742 = vmatprep.mubr.f32.mxu0 0.0
  %743 = vmatmul.mubr.f32.gmra.mxu0 %v550
  %v744 = vpop.f32.mrf.mxu0
  %v745 = vadd.f32 %v576, %v744
  %v746 = vpop.f32.mrf.mxu0
  %747 = vmatprep.mubr.f32.mxu0 0.0
  %748 = vmatmul.mubr.f32.gmra.mxu0 %v551
  %v749 = vpop.f32.mrf.mxu0
  %v750 = vadd.f32 %v576, %v749
  %v751 = vpop.f32.mrf.mxu0
  %752 = vmatprep.mubr.f32.mxu0 0.0
  %753 = vmatmul.mubr.f32.gmra.mxu0 %v552
  %v754 = vpop.f32.mrf.mxu0
  %v755 = vadd.f32 %v576, %v754
  %v756 = vpop.f32.mrf.mxu0
  %757 = vmatprep.mubr.f32.mxu0 0.0
  %758 = vmatmul.mubr.f32.gmra.mxu0 %v553
  %v759 = vpop.f32.mrf.mxu0
  %v760 = vadd.f32 %v576, %v759
  %v761 = vpop.f32.mrf.mxu0
  %762 = vmatprep.mubr.f32.mxu0 0.0
  %763 = vmatmul.mubr.f32.gmra.mxu0 %v554
  %v764 = vpop.f32.mrf.mxu0
  %v765 = vadd.f32 %v576, %v764
  %v766 = vpop.f32.mrf.mxu0
  %767 = vdwg.mxu0
  %v768 = vmax.f32 %v645, 0.0
  %v769 = vmax.f32 %v650, 0.0
  %v770 = vmax.f32 %v655, 0.0
  %v771 = vmax.f32 %v660, 0.0
  %v772 = vmax.f32 %v665, 0.0
  %v773 = vmax.f32 %v670, 0.0
  %v774 = vmax.f32 %v675, 0.0
  %v775 = vmax.f32 %v680, 0.0
  %v776 = vmax.f32 %v685, 0.0
  %v777 = vmax.f32 %v690, 0.0
  %v778 = vmax.f32 %v695, 0.0
  %v779 = vmax.f32 %v700, 0.0
  %v780 = vmax.f32 %v705, 0.0
  %v781 = vmax.f32 %v710, 0.0
  %v782 = vmax.f32 %v715, 0.0
  %v783 = vmax.f32 %v720, 0.0
  %v784 = vmax.f32 %v725, 0.0
  %v785 = vmax.f32 %v730, 0.0
  %v786 = vmax.f32 %v735, 0.0
  %v787 = vmax.f32 %v740, 0.0
  %v788 = vmax.f32 %v745, 0.0
  %v789 = vmax.f32 %v750, 0.0
  %v790 = vmax.f32 %v755, 0.0
  %v791 = vmax.f32 %v760, 0.0
  %v792 = vmax.f32 %v765, 0.0
  %v793 = vld [vmem:[%s7] sm:$0x1]
  %v794 = vld [vmem:[%s8] sm:$0x1]
  %v795 = vsel %vm150, %v768, 0.0
  %v796 = vsel %vm150, %v769, 0.0
  %v797 = vadd.f32 %v795, %v796
  %v798 = vsel %vm150, %v770, 0.0
  %v799 = vadd.f32 %v797, %v798
  %v800 = vsel %vm150, %v771, 0.0
  %v801 = vadd.f32 %v799, %v800
  %v802 = vsel %vm150, %v772, 0.0
  %v803 = vadd.f32 %v801, %v802
  %v804 = vsel %vm150, %v773, 0.0
  %v805 = vadd.f32 %v803, %v804
  %v806 = vsel %vm150, %v774, 0.0
  %v807 = vadd.f32 %v805, %v806
  %v808 = vsel %vm150, %v775, 0.0
  %v809 = vadd.f32 %v807, %v808
  %v810 = vsel %vm150, %v776, 0.0
  %v811 = vadd.f32 %v809, %v810
  %v812 = vsel %vm150, %v777, 0.0
  %v813 = vadd.f32 %v811, %v812
  %v814 = vsel %vm150, %v778, 0.0
  %v815 = vadd.f32 %v813, %v814
  %v816 = vsel %vm150, %v779, 0.0
  %v817 = vadd.f32 %v815, %v816
  %v818 = vsel %vm150, %v780, 0.0
  %v819 = vadd.f32 %v817, %v818
  %v820 = vsel %vm150, %v781, 0.0
  %v821 = vadd.f32 %v819, %v820
  %v822 = vsel %vm150, %v782, 0.0
  %v823 = vadd.f32 %v821, %v822
  %v824 = vsel %vm150, %v783, 0.0
  %v825 = vadd.f32 %v823, %v824
  %v826 = vsel %vm150, %v784, 0.0
  %v827 = vadd.f32 %v825, %v826
  %v828 = vsel %vm150, %v785, 0.0
  %v829 = vadd.f32 %v827, %v828
  %v830 = vsel %vm150, %v786, 0.0
  %v831 = vadd.f32 %v829, %v830
  %v832 = vsel %vm150, %v787, 0.0
  %v833 = vadd.f32 %v831, %v832
  %v834 = vsel %vm150, %v788, 0.0
  %v835 = vadd.f32 %v833, %v834
  %v836 = vsel %vm150, %v789, 0.0
  %v837 = vadd.f32 %v835, %v836
  %v838 = vsel %vm150, %v790, 0.0
  %v839 = vadd.f32 %v837, %v838
  %v840 = vsel %vm150, %v791, 0.0
  %v841 = vadd.f32 %v839, %v840
  %v842 = vsel %vm150, %v792, 0.0
  %v843 = vadd.f32 %v841, %v842
  %v844 = vrot.slane %v843, 4
  %v845 = vadd.f32 %v843, %v844
  %v846 = vrot.slane %v845, 2
  %v847 = vadd.f32 %v845, %v846
  %v848 = vrot.slane %v847, 1
  %v849 = vadd.f32 %v847, %v848
  %v850 = vmul.f32 %v849, %v383
  %v851 = vsub.f32 %v768, %v850
  %v852 = vsub.f32 %v769, %v850
  %v853 = vsub.f32 %v770, %v850
  %v854 = vsub.f32 %v771, %v850
  %v855 = vsub.f32 %v772, %v850
  %v856 = vsub.f32 %v773, %v850
  %v857 = vsub.f32 %v774, %v850
  %v858 = vsub.f32 %v775, %v850
  %v859 = vsub.f32 %v776, %v850
  %v860 = vsub.f32 %v777, %v850
  %v861 = vsub.f32 %v778, %v850
  %v862 = vsub.f32 %v779, %v850
  %v863 = vsub.f32 %v780, %v850
  %v864 = vsub.f32 %v781, %v850
  %v865 = vsub.f32 %v782, %v850
  %v866 = vsub.f32 %v783, %v850
  %v867 = vsub.f32 %v784, %v850
  %v868 = vsub.f32 %v785, %v850
  %v869 = vsub.f32 %v786, %v850
  %v870 = vsub.f32 %v787, %v850
  %v871 = vsub.f32 %v788, %v850
  %v872 = vsub.f32 %v789, %v850
  %v873 = vsub.f32 %v790, %v850
  %v874 = vsub.f32 %v791, %v850
  %v875 = vsub.f32 %v792, %v850
  %v876 = vmul.f32 %v851, %v851
  %v877 = vmul.f32 %v852, %v852
  %v878 = vmul.f32 %v853, %v853
  %v879 = vmul.f32 %v854, %v854
  %v880 = vmul.f32 %v855, %v855
  %v881 = vmul.f32 %v856, %v856
  %v882 = vmul.f32 %v857, %v857
  %v883 = vmul.f32 %v858, %v858
  %v884 = vmul.f32 %v859, %v859
  %v885 = vmul.f32 %v860, %v860
  %v886 = vmul.f32 %v861, %v861
  %v887 = vmul.f32 %v862, %v862
  %v888 = vmul.f32 %v863, %v863
  %v889 = vmul.f32 %v864, %v864
  %v890 = vmul.f32 %v865, %v865
  %v891 = vmul.f32 %v866, %v866
  %v892 = vmul.f32 %v867, %v867
  %v893 = vmul.f32 %v868, %v868
  %v894 = vmul.f32 %v869, %v869
  %v895 = vmul.f32 %v870, %v870
  %v896 = vmul.f32 %v871, %v871
  %v897 = vmul.f32 %v872, %v872
  %v898 = vmul.f32 %v873, %v873
  %v899 = vmul.f32 %v874, %v874
  %v900 = vmul.f32 %v875, %v875
  %v901 = vsel %vm150, %v876, 0.0
  %v902 = vsel %vm150, %v877, 0.0
  %v903 = vadd.f32 %v901, %v902
  %v904 = vsel %vm150, %v878, 0.0
  %v905 = vadd.f32 %v903, %v904
  %v906 = vsel %vm150, %v879, 0.0
  %v907 = vadd.f32 %v905, %v906
  %v908 = vsel %vm150, %v880, 0.0
  %v909 = vadd.f32 %v907, %v908
  %v910 = vsel %vm150, %v881, 0.0
  %v911 = vadd.f32 %v909, %v910
  %v912 = vsel %vm150, %v882, 0.0
  %v913 = vadd.f32 %v911, %v912
  %v914 = vsel %vm150, %v883, 0.0
  %v915 = vadd.f32 %v913, %v914
  %v916 = vsel %vm150, %v884, 0.0
  %v917 = vadd.f32 %v915, %v916
  %v918 = vsel %vm150, %v885, 0.0
  %v919 = vadd.f32 %v917, %v918
  %v920 = vsel %vm150, %v886, 0.0
  %v921 = vadd.f32 %v919, %v920
  %v922 = vsel %vm150, %v887, 0.0
  %v923 = vadd.f32 %v921, %v922
  %v924 = vsel %vm150, %v888, 0.0
  %v925 = vadd.f32 %v923, %v924
  %v926 = vsel %vm150, %v889, 0.0
  %v927 = vadd.f32 %v925, %v926
  %v928 = vsel %vm150, %v890, 0.0
  %v929 = vadd.f32 %v927, %v928
  %v930 = vsel %vm150, %v891, 0.0
  %v931 = vadd.f32 %v929, %v930
  %v932 = vsel %vm150, %v892, 0.0
  %v933 = vadd.f32 %v931, %v932
  %v934 = vsel %vm150, %v893, 0.0
  %v935 = vadd.f32 %v933, %v934
  %v936 = vsel %vm150, %v894, 0.0
  %v937 = vadd.f32 %v935, %v936
  %v938 = vsel %vm150, %v895, 0.0
  %v939 = vadd.f32 %v937, %v938
  %v940 = vsel %vm150, %v896, 0.0
  %v941 = vadd.f32 %v939, %v940
  %v942 = vsel %vm150, %v897, 0.0
  %v943 = vadd.f32 %v941, %v942
  %v944 = vsel %vm150, %v898, 0.0
  %v945 = vadd.f32 %v943, %v944
  %v946 = vsel %vm150, %v899, 0.0
  %v947 = vadd.f32 %v945, %v946
  %v948 = vsel %vm150, %v900, 0.0
  %v949 = vadd.f32 %v947, %v948
  %v950 = vrot.slane %v949, 4
  %v951 = vadd.f32 %v949, %v950
  %v952 = vrot.slane %v951, 2
  %v953 = vadd.f32 %v951, %v952
  %v954 = vrot.slane %v953, 1
  %v955 = vadd.f32 %v953, %v954
  %v956 = vmul.f32 %v955, %v383
  %v957 = vadd.f32 %v956, 1e-05
  %v958 = vrsqrt.pop %v957
  %v959 = vmul.f32 %v851, %v958
  %v960 = vmul.f32 %v852, %v958
  %v961 = vmul.f32 %v853, %v958
  %v962 = vmul.f32 %v854, %v958
  %v963 = vmul.f32 %v855, %v958
  %v964 = vmul.f32 %v856, %v958
  %v965 = vmul.f32 %v857, %v958
  %v966 = vmul.f32 %v858, %v958
  %v967 = vmul.f32 %v859, %v958
  %v968 = vmul.f32 %v860, %v958
  %v969 = vmul.f32 %v861, %v958
  %v970 = vmul.f32 %v862, %v958
  %v971 = vmul.f32 %v863, %v958
  %v972 = vmul.f32 %v864, %v958
  %v973 = vmul.f32 %v865, %v958
  %v974 = vmul.f32 %v866, %v958
  %v975 = vmul.f32 %v867, %v958
  %v976 = vmul.f32 %v868, %v958
  %v977 = vmul.f32 %v869, %v958
  %v978 = vmul.f32 %v870, %v958
  %v979 = vmul.f32 %v871, %v958
  %v980 = vmul.f32 %v872, %v958
  %v981 = vmul.f32 %v873, %v958
  %v982 = vmul.f32 %v874, %v958
  %v983 = vmul.f32 %v875, %v958
  %v985 = vlaneseq
  %v986 = vshrl.u32 %v985, 7
  %v987 = vsub.s32 0, %v986
  %v988 = vrot.slane %v793, %v987
  %v990 = vmul.f32 %v959, %v988
  %v991 = vmul.f32 %v960, %v988
  %v992 = vmul.f32 %v961, %v988
  %v993 = vmul.f32 %v962, %v988
  %v994 = vmul.f32 %v963, %v988
  %v995 = vmul.f32 %v964, %v988
  %v996 = vmul.f32 %v965, %v988
  %v997 = vmul.f32 %v966, %v988
  %v998 = vmul.f32 %v967, %v988
  %v999 = vmul.f32 %v968, %v988
  %v1000 = vmul.f32 %v969, %v988
  %v1001 = vmul.f32 %v970, %v988
  %v1002 = vmul.f32 %v971, %v988
  %v1003 = vmul.f32 %v972, %v988
  %v1004 = vmul.f32 %v973, %v988
  %v1005 = vmul.f32 %v974, %v988
  %v1006 = vmul.f32 %v975, %v988
  %v1007 = vmul.f32 %v976, %v988
  %v1008 = vmul.f32 %v977, %v988
  %v1009 = vmul.f32 %v978, %v988
  %v1010 = vmul.f32 %v979, %v988
  %v1011 = vmul.f32 %v980, %v988
  %v1012 = vmul.f32 %v981, %v988
  %v1013 = vmul.f32 %v982, %v988
  %v1014 = vmul.f32 %v983, %v988
  %v1016 = vlaneseq
  %v1017 = vshrl.u32 %v1016, 7
  %v1018 = vsub.s32 0, %v1017
  %v1019 = vrot.slane %v794, %v1018
  %v1021 = vadd.f32 %v990, %v1019
  %v1022 = vadd.f32 %v991, %v1019
  %v1023 = vadd.f32 %v992, %v1019
  %v1024 = vadd.f32 %v993, %v1019
  %v1025 = vadd.f32 %v994, %v1019
  %v1026 = vadd.f32 %v995, %v1019
  %v1027 = vadd.f32 %v996, %v1019
  %v1028 = vadd.f32 %v997, %v1019
  %v1029 = vadd.f32 %v998, %v1019
  %v1030 = vadd.f32 %v999, %v1019
  %v1031 = vadd.f32 %v1000, %v1019
  %v1032 = vadd.f32 %v1001, %v1019
  %v1033 = vadd.f32 %v1002, %v1019
  %v1034 = vadd.f32 %v1003, %v1019
  %v1035 = vadd.f32 %v1004, %v1019
  %v1036 = vadd.f32 %v1005, %v1019
  %v1037 = vadd.f32 %v1006, %v1019
  %v1038 = vadd.f32 %v1007, %v1019
  %v1039 = vadd.f32 %v1008, %v1019
  %v1040 = vadd.f32 %v1009, %v1019
  %v1041 = vadd.f32 %v1010, %v1019
  %v1042 = vadd.f32 %v1011, %v1019
  %v1043 = vadd.f32 %v1012, %v1019
  %v1044 = vadd.f32 %v1013, %v1019
  %v1045 = vadd.f32 %v1014, %v1019
  %v1046 = vld [vmem:[%s9] sm:$0xff]
  %v1047 = vld [vmem:[%s9 + $0x8] sm:$0xff]
  %v1048 = vld [vmem:[%s9 + $0x10] sm:$0xff]
  %v1049 = vld [vmem:[%s9 + $0x18] sm:$0xff]
  %v1050 = vld [vmem:[%s10] sm:$0x1]
  %v1052 = vlaneseq
  %v1053 = vshrl.u32 %v1052, 7
  %v1054 = vsub.s32 0, %v1053
  %v1055 = vrot.slane %v1050, %v1054
  %v1058 = vsel %vm150, %v1021, 0
  %v1061 = vsel %vm150, %v1022, 0
  %v1064 = vsel %vm150, %v1023, 0
  %v1067 = vsel %vm150, %v1024, 0
  %v1070 = vsel %vm150, %v1025, 0
  %v1073 = vsel %vm150, %v1026, 0
  %v1076 = vsel %vm150, %v1027, 0
  %v1079 = vsel %vm150, %v1028, 0
  %v1082 = vsel %vm150, %v1029, 0
  %v1085 = vsel %vm150, %v1030, 0
  %v1088 = vsel %vm150, %v1031, 0
  %v1091 = vsel %vm150, %v1032, 0
  %v1094 = vsel %vm150, %v1033, 0
  %v1097 = vsel %vm150, %v1034, 0
  %v1100 = vsel %vm150, %v1035, 0
  %v1103 = vsel %vm150, %v1036, 0
  %v1106 = vsel %vm150, %v1037, 0
  %v1109 = vsel %vm150, %v1038, 0
  %v1112 = vsel %vm150, %v1039, 0
  %v1115 = vsel %vm150, %v1040, 0
  %v1118 = vsel %vm150, %v1041, 0
  %v1121 = vsel %vm150, %v1042, 0
  %v1124 = vsel %vm150, %v1043, 0
  %v1127 = vsel %vm150, %v1044, 0
  %v1130 = vsel %vm150, %v1045, 0
  %1132 = vmatprep.subr.mxu0 0.0
  %1133 = vmatpush1.msra.mxu0 0.0
  %1134 = vmatprep.subr.mxu0 0.0
  %1135 = vmatpush1.msra.mxu0 0.0
  %1136 = vmatprep.subr.mxu0 0.0
  %1137 = vmatpush1.msra.mxu0 0.0
  %1138 = vmatprep.subr.mxu0 0.0
  %1139 = vmatpush1.msra.mxu0 0.0
  %1140 = vmatprep.subr.mxu0 0.0
  %1141 = vmatpush1.msra.mxu0 0.0
  %1142 = vmatprep.subr.mxu0 0.0
  %1143 = vmatpush1.msra.mxu0 0.0
  %1144 = vmatprep.subr.mxu0 0.0
  %1145 = vmatpush1.msra.mxu0 0.0
  %1146 = vmatprep.subr.mxu0 0.0
  %1147 = vmatpush1.msra.mxu0 0.0
  %1148 = vmatprep.subr.mxu0 0.0
  %1149 = vmatpush1.msra.mxu0 0.0
  %1150 = vmatprep.subr.mxu0 0.0
  %1151 = vmatpush1.msra.mxu0 0.0
  %1152 = vmatprep.subr.mxu0 0.0
  %1153 = vmatpush1.msra.mxu0 0.0
  %1154 = vmatprep.subr.mxu0 0.0
  %1155 = vmatpush1.msra.mxu0 0.0
  %1156 = vmatprep.subr.mxu0 0.0
  %1157 = vmatpush1.msra.mxu0 %v1049
  %1158 = vmatprep.subr.mxu0 0.0
  %1159 = vmatpush1.msra.mxu0 %v1048
  %1160 = vmatprep.subr.mxu0 0.0
  %1161 = vmatpush1.msra.mxu0 %v1047
  %1162 = vmatprep.subr.mxu0 0.0
  %1163 = vmatpush1.msra.mxu0 %v1046
  %1164 = vmatprep.subr.mxu0 0.0
  %1165 = vmatpush2.msra.mxu0 0.0
  %1166 = vmatprep.subr.mxu0 0.0
  %1167 = vmatpush2.msra.mxu0 0.0
  %1168 = vmatprep.subr.mxu0 0.0
  %1169 = vmatpush2.msra.mxu0 0.0
  %1170 = vmatprep.subr.mxu0 0.0
  %1171 = vmatpush2.msra.mxu0 0.0
  %1172 = vmatprep.subr.mxu0 0.0
  %1173 = vmatpush2.msra.mxu0 0.0
  %1174 = vmatprep.subr.mxu0 0.0
  %1175 = vmatpush2.msra.mxu0 0.0
  %1176 = vmatprep.subr.mxu0 0.0
  %1177 = vmatpush2.msra.mxu0 0.0
  %1178 = vmatprep.subr.mxu0 0.0
  %1179 = vmatpush2.msra.mxu0 0.0
  %1180 = vmatprep.subr.mxu0 0.0
  %1181 = vmatpush2.msra.mxu0 0.0
  %1182 = vmatprep.subr.mxu0 0.0
  %1183 = vmatpush2.msra.mxu0 0.0
  %1184 = vmatprep.subr.mxu0 0.0
  %1185 = vmatpush2.msra.mxu0 0.0
  %1186 = vmatprep.subr.mxu0 0.0
  %1187 = vmatpush2.msra.mxu0 0.0
  %1188 = vmatprep.subr.mxu0 0.0
  %1189 = vmatpush2.msra.mxu0 0.0
  %1190 = vmatprep.subr.mxu0 0.0
  %1191 = vmatpush2.msra.mxu0 0.0
  %1192 = vmatprep.subr.mxu0 0.0
  %1193 = vmatpush2.msra.mxu0 0.0
  %1194 = vmatprep.subr.mxu0 0.0
  %1195 = vmatpush2.msra.mxu0 0.0
  %1196 = vmatprep.mubr.f32.mxu0 0.0
  %1197 = vmatmul.mubr.f32.gmra.mxu0 %v1058
  %v1198 = vpop.f32.mrf.mxu0
  %v1199 = vadd.f32 %v1055, %v1198
  %v1200 = vpop.f32.mrf.mxu0
  %1201 = vmatprep.mubr.f32.mxu0 0.0
  %1202 = vmatmul.mubr.f32.gmra.mxu0 %v1061
  %v1203 = vpop.f32.mrf.mxu0
  %v1204 = vadd.f32 %v1055, %v1203
  %v1205 = vpop.f32.mrf.mxu0
  %1206 = vmatprep.mubr.f32.mxu0 0.0
  %1207 = vmatmul.mubr.f32.gmra.mxu0 %v1064
  %v1208 = vpop.f32.mrf.mxu0
  %v1209 = vadd.f32 %v1055, %v1208
  %v1210 = vpop.f32.mrf.mxu0
  %1211 = vmatprep.mubr.f32.mxu0 0.0
  %1212 = vmatmul.mubr.f32.gmra.mxu0 %v1067
  %v1213 = vpop.f32.mrf.mxu0
  %v1214 = vadd.f32 %v1055, %v1213
  %v1215 = vpop.f32.mrf.mxu0
  %1216 = vmatprep.mubr.f32.mxu0 0.0
  %1217 = vmatmul.mubr.f32.gmra.mxu0 %v1070
  %v1218 = vpop.f32.mrf.mxu0
  %v1219 = vadd.f32 %v1055, %v1218
  %v1220 = vpop.f32.mrf.mxu0
  %1221 = vmatprep.mubr.f32.mxu0 0.0
  %1222 = vmatmul.mubr.f32.gmra.mxu0 %v1073
  %v1223 = vpop.f32.mrf.mxu0
  %v1224 = vadd.f32 %v1055, %v1223
  %v1225 = vpop.f32.mrf.mxu0
  %1226 = vmatprep.mubr.f32.mxu0 0.0
  %1227 = vmatmul.mubr.f32.gmra.mxu0 %v1076
  %v1228 = vpop.f32.mrf.mxu0
  %v1229 = vadd.f32 %v1055, %v1228
  %v1230 = vpop.f32.mrf.mxu0
  %1231 = vmatprep.mubr.f32.mxu0 0.0
  %1232 = vmatmul.mubr.f32.gmra.mxu0 %v1079
  %v1233 = vpop.f32.mrf.mxu0
  %v1234 = vadd.f32 %v1055, %v1233
  %v1235 = vpop.f32.mrf.mxu0
  %1236 = vmatprep.mubr.f32.mxu0 0.0
  %1237 = vmatmul.mubr.f32.gmra.mxu0 %v1082
  %v1238 = vpop.f32.mrf.mxu0
  %v1239 = vadd.f32 %v1055, %v1238
  %v1240 = vpop.f32.mrf.mxu0
  %1241 = vmatprep.mubr.f32.mxu0 0.0
  %1242 = vmatmul.mubr.f32.gmra.mxu0 %v1085
  %v1243 = vpop.f32.mrf.mxu0
  %v1244 = vadd.f32 %v1055, %v1243
  %v1245 = vpop.f32.mrf.mxu0
  %1246 = vmatprep.mubr.f32.mxu0 0.0
  %1247 = vmatmul.mubr.f32.gmra.mxu0 %v1088
  %v1248 = vpop.f32.mrf.mxu0
  %v1249 = vadd.f32 %v1055, %v1248
  %v1250 = vpop.f32.mrf.mxu0
  %1251 = vmatprep.mubr.f32.mxu0 0.0
  %1252 = vmatmul.mubr.f32.gmra.mxu0 %v1091
  %v1253 = vpop.f32.mrf.mxu0
  %v1254 = vadd.f32 %v1055, %v1253
  %v1255 = vpop.f32.mrf.mxu0
  %1256 = vmatprep.mubr.f32.mxu0 0.0
  %1257 = vmatmul.mubr.f32.gmra.mxu0 %v1094
  %v1258 = vpop.f32.mrf.mxu0
  %v1259 = vadd.f32 %v1055, %v1258
  %v1260 = vpop.f32.mrf.mxu0
  %1261 = vmatprep.mubr.f32.mxu0 0.0
  %1262 = vmatmul.mubr.f32.gmra.mxu0 %v1097
  %v1263 = vpop.f32.mrf.mxu0
  %v1264 = vadd.f32 %v1055, %v1263
  %v1265 = vpop.f32.mrf.mxu0
  %1266 = vmatprep.mubr.f32.mxu0 0.0
  %1267 = vmatmul.mubr.f32.gmra.mxu0 %v1100
  %v1268 = vpop.f32.mrf.mxu0
  %v1269 = vadd.f32 %v1055, %v1268
  %v1270 = vpop.f32.mrf.mxu0
  %1271 = vmatprep.mubr.f32.mxu0 0.0
  %1272 = vmatmul.mubr.f32.gmra.mxu0 %v1103
  %v1273 = vpop.f32.mrf.mxu0
  %v1274 = vadd.f32 %v1055, %v1273
  %v1275 = vpop.f32.mrf.mxu0
  %1276 = vmatprep.mubr.f32.mxu0 0.0
  %1277 = vmatmul.mubr.f32.gmra.mxu0 %v1106
  %v1278 = vpop.f32.mrf.mxu0
  %v1279 = vadd.f32 %v1055, %v1278
  %v1280 = vpop.f32.mrf.mxu0
  %1281 = vmatprep.mubr.f32.mxu0 0.0
  %1282 = vmatmul.mubr.f32.gmra.mxu0 %v1109
  %v1283 = vpop.f32.mrf.mxu0
  %v1284 = vadd.f32 %v1055, %v1283
  %v1285 = vpop.f32.mrf.mxu0
  %1286 = vmatprep.mubr.f32.mxu0 0.0
  %1287 = vmatmul.mubr.f32.gmra.mxu0 %v1112
  %v1288 = vpop.f32.mrf.mxu0
  %v1289 = vadd.f32 %v1055, %v1288
  %v1290 = vpop.f32.mrf.mxu0
  %1291 = vmatprep.mubr.f32.mxu0 0.0
  %1292 = vmatmul.mubr.f32.gmra.mxu0 %v1115
  %v1293 = vpop.f32.mrf.mxu0
  %v1294 = vadd.f32 %v1055, %v1293
  %v1295 = vpop.f32.mrf.mxu0
  %1296 = vmatprep.mubr.f32.mxu0 0.0
  %1297 = vmatmul.mubr.f32.gmra.mxu0 %v1118
  %v1298 = vpop.f32.mrf.mxu0
  %v1299 = vadd.f32 %v1055, %v1298
  %v1300 = vpop.f32.mrf.mxu0
  %1301 = vmatprep.mubr.f32.mxu0 0.0
  %1302 = vmatmul.mubr.f32.gmra.mxu0 %v1121
  %v1303 = vpop.f32.mrf.mxu0
  %v1304 = vadd.f32 %v1055, %v1303
  %v1305 = vpop.f32.mrf.mxu0
  %1306 = vmatprep.mubr.f32.mxu0 0.0
  %1307 = vmatmul.mubr.f32.gmra.mxu0 %v1124
  %v1308 = vpop.f32.mrf.mxu0
  %v1309 = vadd.f32 %v1055, %v1308
  %v1310 = vpop.f32.mrf.mxu0
  %1311 = vmatprep.mubr.f32.mxu0 0.0
  %1312 = vmatmul.mubr.f32.gmra.mxu0 %v1127
  %v1313 = vpop.f32.mrf.mxu0
  %v1314 = vadd.f32 %v1055, %v1313
  %v1315 = vpop.f32.mrf.mxu0
  %1316 = vmatprep.mubr.f32.mxu0 0.0
  %1317 = vmatmul.mubr.f32.gmra.mxu0 %v1130
  %v1318 = vpop.f32.mrf.mxu0
  %v1319 = vadd.f32 %v1055, %v1318
  %v1320 = vpop.f32.mrf.mxu0
  %1321 = vdwg.mxu0
  %vm1322 = vcmask 80896
  %1323 = vst.msk [vmem:[%s11] sm:$0xff] %vm1322, %v1199
  %1324 = vst.msk [vmem:[%s11 + $0x8] sm:$0xff] %vm1322, %v1204
  %1325 = vst.msk [vmem:[%s11 + $0x10] sm:$0xff] %vm1322, %v1209
  %1326 = vst.msk [vmem:[%s11 + $0x18] sm:$0xff] %vm1322, %v1214
  %1327 = vst.msk [vmem:[%s11 + $0x20] sm:$0xff] %vm1322, %v1219
  %1328 = vst.msk [vmem:[%s11 + $0x28] sm:$0xff] %vm1322, %v1224
  %1329 = vst.msk [vmem:[%s11 + $0x30] sm:$0xff] %vm1322, %v1229
  %1330 = vst.msk [vmem:[%s11 + $0x38] sm:$0xff] %vm1322, %v1234
  %1331 = vst.msk [vmem:[%s11 + $0x40] sm:$0xff] %vm1322, %v1239
  %1332 = vst.msk [vmem:[%s11 + $0x48] sm:$0xff] %vm1322, %v1244
  %1333 = vst.msk [vmem:[%s11 + $0x50] sm:$0xff] %vm1322, %v1249
  %1334 = vst.msk [vmem:[%s11 + $0x58] sm:$0xff] %vm1322, %v1254
  %1335 = vst.msk [vmem:[%s11 + $0x60] sm:$0xff] %vm1322, %v1259
  %1336 = vst.msk [vmem:[%s11 + $0x68] sm:$0xff] %vm1322, %v1264
  %1337 = vst.msk [vmem:[%s11 + $0x70] sm:$0xff] %vm1322, %v1269
  %1338 = vst.msk [vmem:[%s11 + $0x78] sm:$0xff] %vm1322, %v1274
  %1339 = vst.msk [vmem:[%s11 + $0x80] sm:$0xff] %vm1322, %v1279
  %1340 = vst.msk [vmem:[%s11 + $0x88] sm:$0xff] %vm1322, %v1284
  %1341 = vst.msk [vmem:[%s11 + $0x90] sm:$0xff] %vm1322, %v1289
  %1342 = vst.msk [vmem:[%s11 + $0x98] sm:$0xff] %vm1322, %v1294
  %1343 = vst.msk [vmem:[%s11 + $0xa0] sm:$0xff] %vm1322, %v1299
  %1344 = vst.msk [vmem:[%s11 + $0xa8] sm:$0xff] %vm1322, %v1304
  %1345 = vst.msk [vmem:[%s11 + $0xb0] sm:$0xff] %vm1322, %v1309
  %1346 = vst.msk [vmem:[%s11 + $0xb8] sm:$0xff] %vm1322, %v1314
  %1347 = vst.msk [vmem:[%s11 + $0xc0] sm:$0xff] %vm1322, %v1319
  // Predicated region
  $region46: #{pixel_classifier_forward.1} parent=0 // pred_check
    _
  $region47: #{pixel_classifier_forward.1} parent=0 // pred_check_branch
    %1349 = sbr.rel (0) target = $region49
  $region48: #{pixel_classifier_forward.1} parent=0 // pred_region
    _
  $region49: #{pixel_classifier_forward.1} parent=0 // pred_fallthru
    _
  // Predicated region
  $region50: #{pixel_classifier_forward.1} parent=0 // pred_check
    _
  $region51: #{pixel_classifier_forward.1} parent=0 // pred_check_branch
    %1351 = sbr.rel (0) target = $region53
  $region52: #{pixel_classifier_forward.1} parent=0 // pred_region
    _
  $region53: #{pixel_classifier_forward.1} parent=0 // pred_fallthru
    _

</llo_original>
